<compile_context>
chip_gen: v7x
topology: tpu7x:2x2x1
jax: 0.10.0
libtpu: 0.0.40
codegen_flags: <defaults>
</compile_context>

<pallas_src>
import functools

import jax
import jax.numpy as jnp
from jax import lax
from jax.experimental import pallas as pl
from jax.experimental.pallas import tpu as pltpu

_LANE = 128      # TPU lane width (last dim of a vreg)
_SUBLANE = 8     # TPU sublane count (second-to-last dim of a vreg, f32)
_MAX_TB = 2048   # upper bound on batch-tile rows
_VMEM_TILE_BUDGET = 24 * 2**20   # bytes of VMEM we allow the double-buffered tiles to use
_VMEM_LIMIT = 32 * 2**20         # explicit scoped-VMEM limit (safe on v5e/v6e/v7x)


def _round_up(x: int, m: int) -> int:
    return (x + m - 1) // m * m


def prepare_params(weight, bias):
    """One-time parameter prep (do this at param-creation time, not per forward).

    Keeps the PyTorch (OUT, IN) layout (no transpose) and zero-pads OUT up to a
    multiple of 128 so the kernel's output lane axis is dense.
    """
    out_size, in_size = weight.shape
    out_pad = _round_up(out_size, _LANE)
    w_p = jnp.pad(weight, ((0, out_pad - out_size), (0, 0)))
    b_p = jnp.pad(bias, (0, out_pad - out_size)).reshape(1, out_pad)
    return w_p, b_p


def _smallphi_kernel(x_ref, w_ref, b_ref, o_ref):
    # x_ref: (TB, IN), w_ref: (OUT_pad, IN)  [PyTorch layout], b_ref: (1, OUT_pad),
    # o_ref: (TB, OUT_pad)
    acc = lax.dot_general(
        x_ref[...], w_ref[...],
        dimension_numbers=(((1,), (1,)), ((), ())),   # contract IN of x with IN of w
        preferred_element_type=jnp.float32,
    )
    acc = acc + b_ref[...]                 # broadcast (1, OUT_pad) over the batch tile
    o_ref[...] = jnp.maximum(acc, 0.0).astype(o_ref.dtype)


def _pick_tile_rows(batch: int, in_size: int, out_pad: int, requested: int) -> int:
    """Largest batch-tile (multiple of 8) such that double-buffered x+out tiles fit the budget."""
    bytes_per_row = (in_size + out_pad) * 4          # f32 x-row + f32 out-row
    vmem_cap_rows = _VMEM_TILE_BUDGET // (2 * bytes_per_row)   # x2 for double buffering
    tb = min(requested, _MAX_TB, int(vmem_cap_rows), _round_up(batch, _SUBLANE))
    tb = max(_SUBLANE, (tb // _SUBLANE) * _SUBLANE)
    return tb


@functools.partial(jax.jit, static_argnames=("out_size", "block_rows"))
def smallphi_forward(x, w_padded, b_padded, *, out_size: int, block_rows: int = 1024):
    """y = relu(x @ weight.T + bias), matching nn.Linear semantics.

    x:        (B, input_size) float32
    w_padded: (out_pad, input_size)  -- PyTorch layout, OUT zero-padded to a multiple of 128
    b_padded: (1, out_pad)
    """
    batch, in_size = x.shape
    out_pad = w_padded.shape[0]
    assert w_padded.shape[1] == in_size
    assert b_padded.shape == (1, out_pad)

    tb = _pick_tile_rows(batch, in_size, out_pad, block_rows)
    b_pad_rows = _round_up(batch, tb)
    if b_pad_rows != batch:
        # Zero-pad the batch so every tile is full; padded rows produce relu(bias) and
        # are sliced off below.
        x = jnp.pad(x, ((0, b_pad_rows - batch), (0, 0)))
    grid = (pl.cdiv(b_pad_rows, tb),)

    y_padded = pl.pallas_call(
        _smallphi_kernel,
        out_shape=jax.ShapeDtypeStruct((b_pad_rows, out_pad), x.dtype),
        grid_spec=pltpu.PrefetchScalarGridSpec(
            num_scalar_prefetch=0,
            grid=grid,
            in_specs=[
                pl.BlockSpec((tb, in_size), lambda i: (i, 0)),        # x tile (pipelined)
                pl.BlockSpec((out_pad, in_size), lambda i: (0, 0)),   # weight (grid-invariant)
                pl.BlockSpec((1, out_pad), lambda i: (0, 0)),         # bias   (grid-invariant)
            ],
            out_specs=pl.BlockSpec((tb, out_pad), lambda i: (i, 0)),
        ),
        compiler_params=pltpu.CompilerParams(
            dimension_semantics=("parallel",),       # batch tiles are independent (2 TCs on v7x)
            vmem_limit_bytes=_VMEM_LIMIT,
        ),
    )(x, w_padded, b_padded)

    return y_padded[:batch, :out_size]


def _reference(x, weight, bias):
    return jnp.maximum(x @ weight.T + bias, 0.0)


if __name__ == "__main__":
    # Small shapes consistent with SmallPhi(input_size=32, output_size=16).
    batch = 8
    input_size = 32
    output_size = 16

    key = jax.random.PRNGKey(0)
    kx, kw, kb, kx2 = jax.random.split(key, 4)

    x = jax.random.normal(kx, (batch, input_size), dtype=jnp.float32)
    bound = 1.0 / jnp.sqrt(input_size)
    weight = jax.random.uniform(kw, (output_size, input_size),
                                minval=-bound, maxval=bound, dtype=jnp.float32)
    bias = jax.random.uniform(kb, (output_size,),
                              minval=-bound, maxval=bound, dtype=jnp.float32)

    # One-time parameter prep (lane-pad OUT, keep PyTorch layout).
    w_p, b_p = prepare_params(weight, bias)

    # 1) Native SmallPhi shapes (single tile).
    y = smallphi_forward(x, w_p, b_p, out_size=output_size)
    jax.block_until_ready(y)
    y_ref = _reference(x, weight, bias)
    assert y.shape == (batch, output_size)
    assert jnp.allclose(y, y_ref, atol=1e-5, rtol=1e-5)

    # 2) Larger flattened batch (non-multiple of the tile) to exercise the tiled grid
    #    and the batch-padding / slicing path.
    big_batch = 1000
    x_big = jax.random.normal(kx2, (big_batch, input_size), dtype=jnp.float32)
    y_big = smallphi_forward(x_big, w_p, b_p, out_size=output_size, block_rows=256)
    jax.block_until_ready(y_big)
    y_big_ref = _reference(x_big, weight, bias)
    assert y_big.shape == (big_batch, output_size)
    assert jnp.allclose(y_big, y_big_ref, atol=1e-5, rtol=1e-5)

    print("KERNEL_OK")
</pallas_src>

<mosaic_0001>
module attributes {stable_mosaic.version = 11 : i64} {
  func.func @_smallphi_kernel(%arg0: i32, %arg1: memref<8x32xf32, #tpu.memory_space<vmem>>, %arg2: memref<128x32xf32, #tpu.memory_space<vmem>>, %arg3: memref<1x128xf32, #tpu.memory_space<vmem>>, %arg4: memref<8x128xf32, #tpu.memory_space<vmem>>) attributes {dimension_semantics = [#tpu.dimension_semantics<parallel>], iteration_bounds = array<i64: 1>, scalar_prefetch = 0 : i64, scratch_operands = 0 : i64, tpu.core_type = #tpu.core_type<tc>, window_params = [{transform_indices = @transform_0, window_bounds = array<i64: 8, 32>}, {pipeline_mode = #tpu.pipeline_mode<synchronous>, transform_indices = @transform_1, window_bounds = array<i64: 128, 32>}, {pipeline_mode = #tpu.pipeline_mode<synchronous>, transform_indices = @transform_2, window_bounds = array<i64: 1, 128>}, {transform_indices = @transform_3, window_bounds = array<i64: 8, 128>}]} {
    %c0 = arith.constant 0 : index
    %c0_0 = arith.constant 0 : index
    %0 = vector.load %arg1[%c0, %c0_0] : memref<8x32xf32, #tpu.memory_space<vmem>>, vector<8x32xf32>
    %c0_1 = arith.constant 0 : index
    %c0_2 = arith.constant 0 : index
    %1 = vector.load %arg2[%c0_1, %c0_2] : memref<128x32xf32, #tpu.memory_space<vmem>>, vector<128x32xf32>
    %cst = arith.constant dense<0.000000e+00> : vector<8x128xf32>
    %2 = tpu.matmul %0, %1, %cst {dimension_numbers = #tpu.dot_dimension_numbers<[1], [1], [0], [0], [0, 0, 1, 0], [], []>} : vector<8x32xf32>, vector<128x32xf32>, vector<8x128xf32> -> vector<8x128xf32>
    %c0_3 = arith.constant 0 : index
    %c0_4 = arith.constant 0 : index
    %3 = vector.load %arg3[%c0_3, %c0_4] : memref<1x128xf32, #tpu.memory_space<vmem>>, vector<1x128xf32>
    %4 = vector.broadcast %3 : vector<1x128xf32> to vector<8x128xf32>
    %5 = arith.addf %2, %4 : vector<8x128xf32>
    %cst_5 = arith.constant 0.000000e+00 : f32
    %6 = vector.broadcast %cst_5 : f32 to vector<8x128xf32>
    %7 = arith.maximumf %5, %6 : vector<8x128xf32>
    %c0_6 = arith.constant 0 : index
    %c0_7 = arith.constant 0 : index
    %8 = vector.load %arg4[%c0_6, %c0_7] : memref<8x128xf32, #tpu.memory_space<vmem>>, vector<8x128xf32>
    tpu.vector_store %arg4[%c0_6, %c0_7], %7 {strides = array<i32>} : memref<8x128xf32, #tpu.memory_space<vmem>>, vector<8x128xf32>,
    return
  }
  func.func @transform_0(%arg0: i32) -> (i32, i32) {
    %c0_i32 = arith.constant 0 : i32
    %c0_i32_0 = arith.constant 0 : i32
    return %arg0, %c0_i32 : i32, i32
  }
  func.func @transform_1(%arg0: i32) -> (i32, i32) {
    %c0_i32 = arith.constant 0 : i32
    %c0_i32_0 = arith.constant 0 : i32
    %c0_i32_1 = arith.constant 0 : i32
    return %c0_i32, %c0_i32_0 : i32, i32
  }
  func.func @transform_2(%arg0: i32) -> (i32, i32) {
    %c0_i32 = arith.constant 0 : i32
    %c0_i32_0 = arith.constant 0 : i32
    %c0_i32_1 = arith.constant 0 : i32
    return %c0_i32, %c0_i32_0 : i32, i32
  }
  func.func @transform_3(%arg0: i32) -> (i32, i32) {
    %c0_i32 = arith.constant 0 : i32
    %c0_i32_0 = arith.constant 0 : i32
    return %arg0, %c0_i32 : i32, i32
  }
}

</mosaic_0001>

<llo_original>
// kernel: smallphi_forward.1
$region0: #{smallphi_forward.1}
  #allocation0 [shape = 'u32[]', space=smem, size = 0x4, offset = 0x4, fixed_abs, tag = 'smem constant byte address 0x4 - core index']
  #allocation1 [shape = 'u32[144,128]{1,0:T(1,128)}', space=vmem, size = 0x12000, scoped, tag = 'internal scratch']
  %s0 = inlined_call_operand.vmem [shape: f32[8,32], index: 0, kind: input, shape index: {}]
  %s1 = inlined_call_operand.vmem [shape: f32[128,32], index: 1, kind: input, shape index: {}]
  %s2 = inlined_call_operand.vmem [shape: f32[1,128], index: 2, kind: input, shape index: {}]
  %s3 = inlined_call_operand.hbm [shape: f32[8,128], index: 3, kind: output, shape index: {}]
  %s4 = sld [smem:[#allocation0]]
  $region22: #{smallphi_forward.1} parent=0
    _
  %s6 = ssub.s32 1, %s4
  %s7 = scalar_select 0, %s6, %s4
  $region1: #{smallphi_forward.1} parent=0
    #allocation2 [shape = 'u8[4096]{0}', space=vmem, size = 0x1000, scoped, tag = 'output window, operand 0, single buffered']
    #allocation3 [shape = 's32[1]{0}', space=sflag, size = 0x4, scoped, tag = 'scoped memory for smallphi_forward.1']
    %8 = vsyncpa [#allocation3], 0
    // Predicated region
    $region2: #{smallphi_forward.1} parent=1 // pred_check
      _
    $region3: #{smallphi_forward.1} parent=1 // pred_check_branch
      %10 = sbr.rel (0) target = $region5
    $region4: #{smallphi_forward.1} parent=1 // pred_region
      _
    $region5: #{smallphi_forward.1} parent=1 // pred_fallthru
      _
    // Predicated region
    $region6: #{smallphi_forward.1} parent=1 // pred_check
      _
    $region7: #{smallphi_forward.1} parent=1 // pred_check_branch
      %12 = sbr.rel (0) target = $region9
    $region8: #{smallphi_forward.1} parent=1 // pred_region
      _
    $region9: #{smallphi_forward.1} parent=1 // pred_fallthru
      _
    // Predicated region
    $region10: #{smallphi_forward.1} parent=1 // pred_check
      _
    $region11: #{smallphi_forward.1} parent=1 // pred_check_branch
      %14 = sbr.rel (0) target = $region13
    $region12: #{smallphi_forward.1} parent=1 // pred_region
      _
    $region13: #{smallphi_forward.1} parent=1 // pred_fallthru
      _
    %v15 = vld [vmem:[%s0] sm:$0xff]
    %v16 = vld [vmem:[%s1] sm:$0xff]
    %v17 = vld [vmem:[%s1 + $0x8] sm:$0xff]
    %v18 = vld [vmem:[%s1 + $0x10] sm:$0xff]
    %v19 = vld [vmem:[%s1 + $0x18] sm:$0xff]
    %v20 = vld [vmem:[%s1 + $0x20] sm:$0xff]
    %v21 = vld [vmem:[%s1 + $0x28] sm:$0xff]
    %v22 = vld [vmem:[%s1 + $0x30] sm:$0xff]
    %v23 = vld [vmem:[%s1 + $0x38] sm:$0xff]
    %v24 = vld [vmem:[%s1 + $0x40] sm:$0xff]
    %v25 = vld [vmem:[%s1 + $0x48] sm:$0xff]
    %v26 = vld [vmem:[%s1 + $0x50] sm:$0xff]
    %v27 = vld [vmem:[%s1 + $0x58] sm:$0xff]
    %v28 = vld [vmem:[%s1 + $0x60] sm:$0xff]
    %v29 = vld [vmem:[%s1 + $0x68] sm:$0xff]
    %v30 = vld [vmem:[%s1 + $0x70] sm:$0xff]
    %v31 = vld [vmem:[%s1 + $0x78] sm:$0xff]
    %v32 = vld [vmem:[%s2] sm:$0x1]
    %v34 = vlaneseq
    %v35 = vshrl.u32 %v34, 7
    %v36 = vsub.s32 0, %v35
    %v37 = vrot.slane %v32, %v36
    %vm39 = vcmask 261120
    %v41 = vsel %vm39, %v15, 0
    %v44 = vsel %vm39, %v16, 0
    %v47 = vsel %vm39, %v17, 0
    %v50 = vsel %vm39, %v18, 0
    %v53 = vsel %vm39, %v19, 0
    %v56 = vsel %vm39, %v20, 0
    %v59 = vsel %vm39, %v21, 0
    %v62 = vsel %vm39, %v22, 0
    %v65 = vsel %vm39, %v23, 0
    %v68 = vsel %vm39, %v24, 0
    %v71 = vsel %vm39, %v25, 0
    %v74 = vsel %vm39, %v26, 0
    %v77 = vsel %vm39, %v27, 0
    %v80 = vsel %vm39, %v28, 0
    %v83 = vsel %vm39, %v29, 0
    %v86 = vsel %vm39, %v30, 0
    %v89 = vsel %vm39, %v31, 0
    %91 = vmatprep.subr.mxu0 0.0
    %92 = vmatpush1.xpose.msra.mxu0 %v44
    %93 = vmatprep.subr.mxu0 0.0
    %94 = vmatpush1.xpose.msra.mxu0 %v47
    %95 = vmatprep.subr.mxu0 0.0
    %96 = vmatpush1.xpose.msra.mxu0 %v50
    %97 = vmatprep.subr.mxu0 0.0
    %98 = vmatpush1.xpose.msra.mxu0 %v53
    %99 = vmatprep.subr.mxu0 0.0
    %100 = vmatpush1.xpose.msra.mxu0 %v56
    %101 = vmatprep.subr.mxu0 0.0
    %102 = vmatpush1.xpose.msra.mxu0 %v59
    %103 = vmatprep.subr.mxu0 0.0
    %104 = vmatpush1.xpose.msra.mxu0 %v62
    %105 = vmatprep.subr.mxu0 0.0
    %106 = vmatpush1.xpose.msra.mxu0 %v65
    %107 = vmatprep.subr.mxu0 0.0
    %108 = vmatpush1.xpose.msra.mxu0 %v68
    %109 = vmatprep.subr.mxu0 0.0
    %110 = vmatpush1.xpose.msra.mxu0 %v71
    %111 = vmatprep.subr.mxu0 0.0
    %112 = vmatpush1.xpose.msra.mxu0 %v74
    %113 = vmatprep.subr.mxu0 0.0
    %114 = vmatpush1.xpose.msra.mxu0 %v77
    %115 = vmatprep.subr.mxu0 0.0
    %116 = vmatpush1.xpose.msra.mxu0 %v80
    %117 = vmatprep.subr.mxu0 0.0
    %118 = vmatpush1.xpose.msra.mxu0 %v83
    %119 = vmatprep.subr.mxu0 0.0
    %120 = vmatpush1.xpose.msra.mxu0 %v86
    %121 = vmatprep.subr.mxu0 0.0
    %122 = vmatpush1.xpose.msra.mxu0 %v89
    %123 = vmatprep.subr.mxu0 0.0
    %124 = vmatpush1.xpose.msra.mxu0 0.0
    %125 = vmatprep.subr.mxu0 0.0
    %126 = vmatpush1.xpose.msra.mxu0 0.0
    %127 = vmatprep.subr.mxu0 0.0
    %128 = vmatpush1.xpose.msra.mxu0 0.0
    %129 = vmatprep.subr.mxu0 0.0
    %130 = vmatpush1.xpose.msra.mxu0 0.0
    %131 = vmatprep.subr.mxu0 0.0
    %132 = vmatpush1.xpose.msra.mxu0 0.0
    %133 = vmatprep.subr.mxu0 0.0
    %134 = vmatpush1.xpose.msra.mxu0 0.0
    %135 = vmatprep.subr.mxu0 0.0
    %136 = vmatpush1.xpose.msra.mxu0 0.0
    %137 = vmatprep.subr.mxu0 0.0
    %138 = vmatpush1.xpose.msra.mxu0 0.0
    %139 = vmatprep.subr.mxu0 0.0
    %140 = vmatpush1.xpose.msra.mxu0 0.0
    %141 = vmatprep.subr.mxu0 0.0
    %142 = vmatpush1.xpose.msra.mxu0 0.0
    %143 = vmatprep.subr.mxu0 0.0
    %144 = vmatpush1.xpose.msra.mxu0 0.0
    %145 = vmatprep.subr.mxu0 0.0
    %146 = vmatpush1.xpose.msra.mxu0 0.0
    %147 = vmatprep.subr.mxu0 0.0
    %148 = vmatpush1.xpose.msra.mxu0 0.0
    %149 = vmatprep.subr.mxu0 0.0
    %150 = vmatpush1.xpose.msra.mxu0 0.0
    %151 = vmatprep.subr.mxu0 0.0
    %152 = vmatpush1.xpose.msra.mxu0 0.0
    %153 = vmatprep.subr.mxu0 0.0
    %154 = vmatpush1.xpose.msra.mxu0 0.0
    %155 = vmatprep.mubr.f32.mxu0 0.0
    %156 = vmatmul.mubr.f32.gmra.mrb[0].mxu0 %v41
    %v157 = vpop.f32.mrb[0].mxu0
    %v158 = vadd.f32 %v37, %v157
    %v159 = vpop.f32.mrb[0].mxu0
    %160 = vdwg.mxu0
    %v161 = vmax.f32 %v158, 0.0
    %162 = vst [vmem:[#allocation2] sm:$0xff] %v161
    // Predicated region
    $region14: #{smallphi_forward.1} parent=1 // pred_check
      _
    $region15: #{smallphi_forward.1} parent=1 // pred_check_branch
      %164 = sbr.rel (0) target = $region17
    $region16: #{smallphi_forward.1} parent=1 // pred_region
      %s166 = ssub.s32 128, 128
      %167 = vsyncadd [#allocation3], %s166
      %s169 = sshll.u32 [#allocation2], 4
      %s170 = int_to_ptr.vmem [resolvable:$true] %s169
      %172 = dma.vmem_to_hbm [thread:$0]  %s170, 128, %s3, [#allocation3]
    $region17: #{smallphi_forward.1} parent=1 // pred_fallthru
      _
    // Predicated region
    $region18: #{smallphi_forward.1} parent=1 // pred_check
      _
    $region19: #{smallphi_forward.1} parent=1 // pred_check_branch
      %174 = sbr.rel (0) target = $region21
    $region20: #{smallphi_forward.1} parent=1 // pred_region
      %175 = dma.done [#allocation3], 128
    $region21: #{smallphi_forward.1} parent=1 // pred_fallthru
      _
    %176 = vsyncpa [#allocation3], 1

</llo_original>
